<compile_context>
chip_gen: v5e
topology: v5e:2x2
jax: 0.10.0
libtpu: 0.0.40
codegen_flags: <defaults>
</compile_context>

<pallas_src>
import jax
import jax.numpy as jnp
from jax import lax
from jax.experimental import pallas as pl
from jax.experimental.pallas import tpu as pltpu

BN_EPS = 1e-5


def conv_bn_add_kernel(p_ref, w_ref, gb_ref, o_ref):
    # Conv as one MXU matmul: (M, K_pad) @ (K_pad, COUT_pad), f32 accumulation.
    acc = jnp.dot(p_ref[...], w_ref[...], preferred_element_type=jnp.float32)
    # (conv bias intentionally omitted: it cancels exactly under the training-mode
    #  BatchNorm mean subtraction below.)

    # BatchNorm2d, training mode: batch statistics over the N*H*W rows, per channel.
    mean = jnp.mean(acc, axis=0, keepdims=True)
    diff = acc - mean
    var = jnp.mean(diff * diff, axis=0, keepdims=True)   # biased variance

    gamma = gb_ref[0:1, :]
    beta = gb_ref[1:2, :]
    # Fold BN affine and FloatFunctional().add(x, x) (== 2*x) into one scale/shift:
    #   out = 2*(gamma*(x-mean)*rsqrt(var+eps) + beta)
    scale = (gamma + gamma) * lax.rsqrt(var + BN_EPS)    # (1, COUT_pad), rsqrt on EUP
    shift = beta + beta
    o_ref[...] = diff * scale + shift


@jax.jit
def conv_bn_add(x_nchw, w, b, gamma, beta):
    """x_nchw: (N, Cin, H, W) f32; w: (Cout, Cin, 3, 3); b/gamma/beta: (Cout,).

    `b` (the conv bias) is accepted for interface parity with the PyTorch module
    but unused: training-mode BN subtracts the batch mean immediately after the
    conv, which cancels any per-channel additive bias exactly.
    """
    del b
    N, Cin, H, W = x_nchw.shape
    Cout, _, KH, KW = w.shape
    K = Cin * KH * KW
    M = N * H * W

    # Lane-friendly padded sizes.
    K_P = ((K + 255) // 256) * 256          # 1584 -> 1792 (= 7*256 = 14*128)
    COUT_P = ((Cout + 127) // 128) * 128    # 192  -> 256

    # im2col in a single XLA op. Output feature ordering is (c, kh, kw) — exactly the
    # PyTorch OIHW weight flattening — and the NHWC output layout means a plain reshape
    # yields (n*h*w, Cin*KH*KW) rows in (n, h, w) order.
    patches = lax.conv_general_dilated_patches(
        x_nchw, filter_shape=(KH, KW), window_strides=(1, 1),
        padding=((1, 1), (1, 1)),
        dimension_numbers=("NCHW", "OIHW", "NHWC"))       # (N, H, W, Cin*KH*KW)
    patches = patches.reshape(M, K)
    patches = jnp.pad(patches, ((0, 0), (0, K_P - K)))                    # (M, K_P)

    w_mat = jnp.pad(w.reshape(Cout, K),
                    ((0, COUT_P - Cout), (0, K_P - K))).T                 # (K_P, COUT_P)
    gb = jnp.pad(jnp.stack([gamma, beta]), ((0, 0), (0, COUT_P - Cout)))  # (2, COUT_P)

    out = pl.pallas_call(
        conv_bn_add_kernel,
        out_shape=jax.ShapeDtypeStruct((M, COUT_P), jnp.float32),
        grid=(1,),
        in_specs=[
            pl.BlockSpec((M, K_P), lambda i: (0, 0)),
            pl.BlockSpec((K_P, COUT_P), lambda i: (0, 0)),
            pl.BlockSpec((2, COUT_P), lambda i: (0, 0)),
        ],
        out_specs=pl.BlockSpec((M, COUT_P), lambda i: (0, 0)),
        compiler_params=pltpu.CompilerParams(
            dimension_semantics=("arbitrary",)),
        cost_estimate=pl.CostEstimate(
            flops=2 * M * K_P * COUT_P,
            transcendentals=COUT_P,
            bytes_accessed=4 * (M * K_P + K_P * COUT_P + 2 * COUT_P + M * COUT_P)),
    )(patches, w_mat, gb)

    # Strip channel padding, back to NCHW.
    return out[:, :Cout].reshape(N, H, W, Cout).transpose(0, 3, 1, 2)


def reference(x_nchw, w, b, gamma, beta):
    """Pure-JAX reference of the same forward pass (conv bias included)."""
    conv = lax.conv_general_dilated(
        x_nchw, w, window_strides=(1, 1), padding=((1, 1), (1, 1)),
        dimension_numbers=("NCHW", "OIHW", "NCHW"))
    conv = conv + b[None, :, None, None]
    mean = jnp.mean(conv, axis=(0, 2, 3), keepdims=True)
    var = jnp.mean((conv - mean) ** 2, axis=(0, 2, 3), keepdims=True)
    xn = (conv - mean) * lax.rsqrt(var + BN_EPS)
    y = xn * gamma[None, :, None, None] + beta[None, :, None, None]
    return y + y


if __name__ == "__main__":
    key = jax.random.PRNGKey(0)
    k_x, k_w, k_b, k_g, k_beta = jax.random.split(key, 5)

    N, Cin, H, W, Cout = 1, 176, 4, 4, 192
    x = jax.random.normal(k_x, (N, Cin, H, W), dtype=jnp.float32)

    # Deterministic synthetic parameters (not a checkpoint load).
    fan_in = Cin * 3 * 3
    bound = 1.0 / (fan_in ** 0.5)
    w = jax.random.uniform(k_w, (Cout, Cin, 3, 3), jnp.float32, -bound, bound)
    b = jax.random.uniform(k_b, (Cout,), jnp.float32, -bound, bound)
    gamma = 1.0 + 0.1 * jax.random.normal(k_g, (Cout,), jnp.float32)
    beta = 0.1 * jax.random.normal(k_beta, (Cout,), jnp.float32)

    out = jax.block_until_ready(conv_bn_add(x, w, b, gamma, beta))
    ref = jax.block_until_ready(reference(x, w, b, gamma, beta))

    assert out.shape == (N, Cout, H, W), out.shape
    assert jnp.allclose(out, ref, atol=2e-3, rtol=2e-3), float(
        jnp.max(jnp.abs(out - ref)))

    print("KERNEL_OK")
</pallas_src>

<mosaic_0001>
module attributes {stable_mosaic.version = 11 : i64} {
  func.func @conv_bn_add_kernel(%arg0: i32, %arg1: memref<16x1792xf32, #tpu.memory_space<vmem>>, %arg2: memref<1792x256xf32, #tpu.memory_space<vmem>>, %arg3: memref<2x256xf32, #tpu.memory_space<vmem>>, %arg4: memref<16x256xf32, #tpu.memory_space<vmem>>) attributes {dimension_semantics = [#tpu.dimension_semantics<arbitrary>], iteration_bounds = array<i64: 1>, scalar_prefetch = 0 : i64, scratch_operands = 0 : i64, tpu.core_type = #tpu.core_type<tc>, window_params = [{pipeline_mode = #tpu.pipeline_mode<synchronous>, transform_indices = @transform_0, window_bounds = array<i64: 16, 1792>}, {pipeline_mode = #tpu.pipeline_mode<synchronous>, transform_indices = @transform_1, window_bounds = array<i64: 1792, 256>}, {pipeline_mode = #tpu.pipeline_mode<synchronous>, transform_indices = @transform_2, window_bounds = array<i64: 2, 256>}, {pipeline_mode = #tpu.pipeline_mode<synchronous>, transform_indices = @transform_3, window_bounds = array<i64: 16, 256>}]} {
    %c0 = arith.constant 0 : index
    %c0_0 = arith.constant 0 : index
    %0 = vector.load %arg1[%c0, %c0_0] : memref<16x1792xf32, #tpu.memory_space<vmem>>, vector<16x1792xf32>
    %c0_1 = arith.constant 0 : index
    %c0_2 = arith.constant 0 : index
    %1 = vector.load %arg2[%c0_1, %c0_2] : memref<1792x256xf32, #tpu.memory_space<vmem>>, vector<1792x256xf32>
    %cst = arith.constant dense<0.000000e+00> : vector<16x256xf32>
    %2 = tpu.matmul %0, %1, %cst {dimension_numbers = #tpu.dot_dimension_numbers<[1], [0], [0], [1], [0, 0, 1, 1], [], []>} : vector<16x1792xf32>, vector<1792x256xf32>, vector<16x256xf32> -> vector<16x256xf32>
    %cst_3 = arith.constant dense<0.000000e+00> : vector<256xf32>
    %3 = vector.multi_reduction <add>, %2, %cst_3 [0] : vector<16x256xf32> to vector<256xf32>
    %4 = vector.shape_cast %3 : vector<256xf32> to vector<1x256xf32>
    %cst_4 = arith.constant 1.600000e+01 : f32
    %5 = vector.broadcast %cst_4 : f32 to vector<1x256xf32>
    %6 = arith.divf %4, %5 : vector<1x256xf32>
    %7 = vector.broadcast %6 : vector<1x256xf32> to vector<16x256xf32>
    %8 = arith.subf %2, %7 : vector<16x256xf32>
    %9 = arith.mulf %8, %8 : vector<16x256xf32>
    %cst_5 = arith.constant dense<0.000000e+00> : vector<256xf32>
    %10 = vector.multi_reduction <add>, %9, %cst_5 [0] : vector<16x256xf32> to vector<256xf32>
    %11 = vector.shape_cast %10 : vector<256xf32> to vector<1x256xf32>
    %cst_6 = arith.constant 1.600000e+01 : f32
    %12 = vector.broadcast %cst_6 : f32 to vector<1x256xf32>
    %13 = arith.divf %11, %12 : vector<1x256xf32>
    %c0_7 = arith.constant 0 : index
    %c0_8 = arith.constant 0 : index
    %14 = vector.load %arg3[%c0_7, %c0_8] : memref<2x256xf32, #tpu.memory_space<vmem>>, vector<1x256xf32>
    %c1 = arith.constant 1 : index
    %c0_9 = arith.constant 0 : index
    %15 = vector.load %arg3[%c1, %c0_9] : memref<2x256xf32, #tpu.memory_space<vmem>>, vector<1x256xf32>
    %16 = arith.addf %14, %14 : vector<1x256xf32>
    %cst_10 = arith.constant 9.99999974E-6 : f32
    %17 = vector.broadcast %cst_10 : f32 to vector<1x256xf32>
    %18 = arith.addf %13, %17 : vector<1x256xf32>
    %19 = math.rsqrt %18 : vector<1x256xf32>
    %20 = arith.mulf %16, %19 : vector<1x256xf32>
    %21 = arith.addf %15, %15 : vector<1x256xf32>
    %22 = vector.broadcast %20 : vector<1x256xf32> to vector<16x256xf32>
    %23 = arith.mulf %8, %22 : vector<16x256xf32>
    %24 = vector.broadcast %21 : vector<1x256xf32> to vector<16x256xf32>
    %25 = arith.addf %23, %24 : vector<16x256xf32>
    %c0_11 = arith.constant 0 : index
    %c0_12 = arith.constant 0 : index
    %26 = vector.load %arg4[%c0_11, %c0_12] : memref<16x256xf32, #tpu.memory_space<vmem>>, vector<16x256xf32>
    tpu.vector_store %arg4[%c0_11, %c0_12], %25 {strides = array<i32>} : memref<16x256xf32, #tpu.memory_space<vmem>>, vector<16x256xf32>,
    return
  }
  func.func @transform_0(%arg0: i32) -> (i32, i32) {
    %c0_i32 = arith.constant 0 : i32
    %c0_i32_0 = arith.constant 0 : i32
    %c0_i32_1 = arith.constant 0 : i32
    return %c0_i32, %c0_i32_0 : i32, i32
  }
  func.func @transform_1(%arg0: i32) -> (i32, i32) {
    %c0_i32 = arith.constant 0 : i32
    %c0_i32_0 = arith.constant 0 : i32
    %c0_i32_1 = arith.constant 0 : i32
    return %c0_i32, %c0_i32_0 : i32, i32
  }
  func.func @transform_2(%arg0: i32) -> (i32, i32) {
    %c0_i32 = arith.constant 0 : i32
    %c0_i32_0 = arith.constant 0 : i32
    %c0_i32_1 = arith.constant 0 : i32
    return %c0_i32, %c0_i32_0 : i32, i32
  }
  func.func @transform_3(%arg0: i32) -> (i32, i32) {
    %c0_i32 = arith.constant 0 : i32
    %c0_i32_0 = arith.constant 0 : i32
    %c0_i32_1 = arith.constant 0 : i32
    return %c0_i32, %c0_i32_0 : i32, i32
  }
}

</mosaic_0001>

<llo_original>
// kernel: conv_bn_add.1
$region0: #{conv_bn_add.1}
  #allocation0 [shape = 'u32[]', space=smem, size = 0x4, offset = 0x4, fixed_abs, tag = 'smem constant byte address 0x4 - core index']
  #allocation1 [shape = 'u32[72,128]{1,0:T(1,128)}', space=vmem, size = 0x9000, scoped, tag = 'internal scratch']
  %s0 = inlined_call_operand.vmem [shape: f32[16,1792], index: 0, kind: input, shape index: {}]
  %s1 = inlined_call_operand.vmem [shape: f32[1792,256], index: 1, kind: input, shape index: {}]
  %s2 = inlined_call_operand.vmem [shape: f32[2,256], index: 2, kind: input, shape index: {}]
  %s3 = inlined_call_operand.vmem [shape: f32[16,256], index: 3, kind: output, shape index: {}]
  %s4 = sld [smem:[#allocation0]]
  $region22: #{conv_bn_add.1} parent=0
    _
  %s6 = ssub.s32 1, %s4
  %s7 = scalar_select 0, %s6, %s4
  // Predicated region
  $region2: #{conv_bn_add.1} parent=0 // pred_check
    _
  $region3: #{conv_bn_add.1} parent=0 // pred_check_branch
    %9 = sbr.rel (0) target = $region5
  $region4: #{conv_bn_add.1} parent=0 // pred_region
    _
  $region5: #{conv_bn_add.1} parent=0 // pred_fallthru
    _
  // Predicated region
  $region6: #{conv_bn_add.1} parent=0 // pred_check
    _
  $region7: #{conv_bn_add.1} parent=0 // pred_check_branch
    %11 = sbr.rel (0) target = $region9
  $region8: #{conv_bn_add.1} parent=0 // pred_region
    _
  $region9: #{conv_bn_add.1} parent=0 // pred_fallthru
    _
  // Predicated region
  $region10: #{conv_bn_add.1} parent=0 // pred_check
    _
  $region11: #{conv_bn_add.1} parent=0 // pred_check_branch
    %13 = sbr.rel (0) target = $region13
  $region12: #{conv_bn_add.1} parent=0 // pred_region
    _
  $region13: #{conv_bn_add.1} parent=0 // pred_fallthru
    _
  %v14 = vld [vmem:[%s0] sm:$0xff]
  %v15 = vld [vmem:[%s0 + $0x8] sm:$0xff]
  %v16 = vld [vmem:[%s0 + $0x10] sm:$0xff]
  %v17 = vld [vmem:[%s0 + $0x18] sm:$0xff]
  %v18 = vld [vmem:[%s0 + $0x20] sm:$0xff]
  %v19 = vld [vmem:[%s0 + $0x28] sm:$0xff]
  %v20 = vld [vmem:[%s0 + $0x30] sm:$0xff]
  %v21 = vld [vmem:[%s0 + $0x38] sm:$0xff]
  %v22 = vld [vmem:[%s0 + $0x40] sm:$0xff]
  %v23 = vld [vmem:[%s0 + $0x48] sm:$0xff]
  %v24 = vld [vmem:[%s0 + $0x50] sm:$0xff]
  %v25 = vld [vmem:[%s0 + $0x58] sm:$0xff]
  %v26 = vld [vmem:[%s0 + $0x60] sm:$0xff]
  %v27 = vld [vmem:[%s0 + $0x68] sm:$0xff]
  %v28 = vld [vmem:[%s0 + $0x70] sm:$0xff]
  %v29 = vld [vmem:[%s0 + $0x78] sm:$0xff]
  %v30 = vld [vmem:[%s0 + $0x80] sm:$0xff]
  %v31 = vld [vmem:[%s0 + $0x88] sm:$0xff]
  %v32 = vld [vmem:[%s0 + $0x90] sm:$0xff]
  %v33 = vld [vmem:[%s0 + $0x98] sm:$0xff]
  %v34 = vld [vmem:[%s0 + $0xa0] sm:$0xff]
  %v35 = vld [vmem:[%s0 + $0xa8] sm:$0xff]
  %v36 = vld [vmem:[%s0 + $0xb0] sm:$0xff]
  %v37 = vld [vmem:[%s0 + $0xb8] sm:$0xff]
  %v38 = vld [vmem:[%s0 + $0xc0] sm:$0xff]
  %v39 = vld [vmem:[%s0 + $0xc8] sm:$0xff]
  %v40 = vld [vmem:[%s0 + $0xd0] sm:$0xff]
  %v41 = vld [vmem:[%s0 + $0xd8] sm:$0xff]
  %v42 = vld [vmem:[%s1] sm:$0xff]
  %v43 = vld [vmem:[%s1 + $0x8] sm:$0xff]
  %v44 = vld [vmem:[%s1 + $0x10] sm:$0xff]
  %v45 = vld [vmem:[%s1 + $0x18] sm:$0xff]
  %v46 = vld [vmem:[%s1 + $0x20] sm:$0xff]
  %v47 = vld [vmem:[%s1 + $0x28] sm:$0xff]
  %v48 = vld [vmem:[%s1 + $0x30] sm:$0xff]
  %v49 = vld [vmem:[%s1 + $0x38] sm:$0xff]
  %v50 = vld [vmem:[%s1 + $0x40] sm:$0xff]
  %v51 = vld [vmem:[%s1 + $0x48] sm:$0xff]
  %v52 = vld [vmem:[%s1 + $0x50] sm:$0xff]
  %v53 = vld [vmem:[%s1 + $0x58] sm:$0xff]
  %v54 = vld [vmem:[%s1 + $0x60] sm:$0xff]
  %v55 = vld [vmem:[%s1 + $0x68] sm:$0xff]
  %v56 = vld [vmem:[%s1 + $0x70] sm:$0xff]
  %v57 = vld [vmem:[%s1 + $0x78] sm:$0xff]
  %v58 = vld [vmem:[%s1 + $0x80] sm:$0xff]
  %v59 = vld [vmem:[%s1 + $0x88] sm:$0xff]
  %v60 = vld [vmem:[%s1 + $0x90] sm:$0xff]
  %v61 = vld [vmem:[%s1 + $0x98] sm:$0xff]
  %v62 = vld [vmem:[%s1 + $0xa0] sm:$0xff]
  %v63 = vld [vmem:[%s1 + $0xa8] sm:$0xff]
  %v64 = vld [vmem:[%s1 + $0xb0] sm:$0xff]
  %v65 = vld [vmem:[%s1 + $0xb8] sm:$0xff]
  %v66 = vld [vmem:[%s1 + $0xc0] sm:$0xff]
  %v67 = vld [vmem:[%s1 + $0xc8] sm:$0xff]
  %v68 = vld [vmem:[%s1 + $0xd0] sm:$0xff]
  %v69 = vld [vmem:[%s1 + $0xd8] sm:$0xff]
  %v70 = vld [vmem:[%s1 + $0xe0] sm:$0xff]
  %v71 = vld [vmem:[%s1 + $0xe8] sm:$0xff]
  %v72 = vld [vmem:[%s1 + $0xf0] sm:$0xff]
  %v73 = vld [vmem:[%s1 + $0xf8] sm:$0xff]
  %v74 = vld [vmem:[%s1 + $0x100] sm:$0xff]
  %v75 = vld [vmem:[%s1 + $0x108] sm:$0xff]
  %v76 = vld [vmem:[%s1 + $0x110] sm:$0xff]
  %v77 = vld [vmem:[%s1 + $0x118] sm:$0xff]
  %v78 = vld [vmem:[%s1 + $0x120] sm:$0xff]
  %v79 = vld [vmem:[%s1 + $0x128] sm:$0xff]
  %v80 = vld [vmem:[%s1 + $0x130] sm:$0xff]
  %v81 = vld [vmem:[%s1 + $0x138] sm:$0xff]
  %v82 = vld [vmem:[%s1 + $0x140] sm:$0xff]
  %v83 = vld [vmem:[%s1 + $0x148] sm:$0xff]
  %v84 = vld [vmem:[%s1 + $0x150] sm:$0xff]
  %v85 = vld [vmem:[%s1 + $0x158] sm:$0xff]
  %v86 = vld [vmem:[%s1 + $0x160] sm:$0xff]
  %v87 = vld [vmem:[%s1 + $0x168] sm:$0xff]
  %v88 = vld [vmem:[%s1 + $0x170] sm:$0xff]
  %v89 = vld [vmem:[%s1 + $0x178] sm:$0xff]
  %v90 = vld [vmem:[%s1 + $0x180] sm:$0xff]
  %v91 = vld [vmem:[%s1 + $0x188] sm:$0xff]
  %v92 = vld [vmem:[%s1 + $0x190] sm:$0xff]
  %v93 = vld [vmem:[%s1 + $0x198] sm:$0xff]
  %v94 = vld [vmem:[%s1 + $0x1a0] sm:$0xff]
  %v95 = vld [vmem:[%s1 + $0x1a8] sm:$0xff]
  %v96 = vld [vmem:[%s1 + $0x1b0] sm:$0xff]
  %v97 = vld [vmem:[%s1 + $0x1b8] sm:$0xff]
  %v98 = vld [vmem:[%s1 + $0x1c0] sm:$0xff]
  %v99 = vld [vmem:[%s1 + $0x1c8] sm:$0xff]
  %v100 = vld [vmem:[%s1 + $0x1d0] sm:$0xff]
  %v101 = vld [vmem:[%s1 + $0x1d8] sm:$0xff]
  %v102 = vld [vmem:[%s1 + $0x1e0] sm:$0xff]
  %v103 = vld [vmem:[%s1 + $0x1e8] sm:$0xff]
  %v104 = vld [vmem:[%s1 + $0x1f0] sm:$0xff]
  %v105 = vld [vmem:[%s1 + $0x1f8] sm:$0xff]
  %v106 = vld [vmem:[%s1 + $0x200] sm:$0xff]
  %v107 = vld [vmem:[%s1 + $0x208] sm:$0xff]
  %v108 = vld [vmem:[%s1 + $0x210] sm:$0xff]
  %v109 = vld [vmem:[%s1 + $0x218] sm:$0xff]
  %v110 = vld [vmem:[%s1 + $0x220] sm:$0xff]
  %v111 = vld [vmem:[%s1 + $0x228] sm:$0xff]
  %v112 = vld [vmem:[%s1 + $0x230] sm:$0xff]
  %v113 = vld [vmem:[%s1 + $0x238] sm:$0xff]
  %v114 = vld [vmem:[%s1 + $0x240] sm:$0xff]
  %v115 = vld [vmem:[%s1 + $0x248] sm:$0xff]
  %v116 = vld [vmem:[%s1 + $0x250] sm:$0xff]
  %v117 = vld [vmem:[%s1 + $0x258] sm:$0xff]
  %v118 = vld [vmem:[%s1 + $0x260] sm:$0xff]
  %v119 = vld [vmem:[%s1 + $0x268] sm:$0xff]
  %v120 = vld [vmem:[%s1 + $0x270] sm:$0xff]
  %v121 = vld [vmem:[%s1 + $0x278] sm:$0xff]
  %v122 = vld [vmem:[%s1 + $0x280] sm:$0xff]
  %v123 = vld [vmem:[%s1 + $0x288] sm:$0xff]
  %v124 = vld [vmem:[%s1 + $0x290] sm:$0xff]
  %v125 = vld [vmem:[%s1 + $0x298] sm:$0xff]
  %v126 = vld [vmem:[%s1 + $0x2a0] sm:$0xff]
  %v127 = vld [vmem:[%s1 + $0x2a8] sm:$0xff]
  %v128 = vld [vmem:[%s1 + $0x2b0] sm:$0xff]
  %v129 = vld [vmem:[%s1 + $0x2b8] sm:$0xff]
  %v130 = vld [vmem:[%s1 + $0x2c0] sm:$0xff]
  %v131 = vld [vmem:[%s1 + $0x2c8] sm:$0xff]
  %v132 = vld [vmem:[%s1 + $0x2d0] sm:$0xff]
  %v133 = vld [vmem:[%s1 + $0x2d8] sm:$0xff]
  %v134 = vld [vmem:[%s1 + $0x2e0] sm:$0xff]
  %v135 = vld [vmem:[%s1 + $0x2e8] sm:$0xff]
  %v136 = vld [vmem:[%s1 + $0x2f0] sm:$0xff]
  %v137 = vld [vmem:[%s1 + $0x2f8] sm:$0xff]
  %v138 = vld [vmem:[%s1 + $0x300] sm:$0xff]
  %v139 = vld [vmem:[%s1 + $0x308] sm:$0xff]
  %v140 = vld [vmem:[%s1 + $0x310] sm:$0xff]
  %v141 = vld [vmem:[%s1 + $0x318] sm:$0xff]
  %v142 = vld [vmem:[%s1 + $0x320] sm:$0xff]
  %v143 = vld [vmem:[%s1 + $0x328] sm:$0xff]
  %v144 = vld [vmem:[%s1 + $0x330] sm:$0xff]
  %v145 = vld [vmem:[%s1 + $0x338] sm:$0xff]
  %v146 = vld [vmem:[%s1 + $0x340] sm:$0xff]
  %v147 = vld [vmem:[%s1 + $0x348] sm:$0xff]
  %v148 = vld [vmem:[%s1 + $0x350] sm:$0xff]
  %v149 = vld [vmem:[%s1 + $0x358] sm:$0xff]
  %v150 = vld [vmem:[%s1 + $0x360] sm:$0xff]
  %v151 = vld [vmem:[%s1 + $0x368] sm:$0xff]
  %v152 = vld [vmem:[%s1 + $0x370] sm:$0xff]
  %v153 = vld [vmem:[%s1 + $0x378] sm:$0xff]
  %v154 = vld [vmem:[%s1 + $0x380] sm:$0xff]
  %v155 = vld [vmem:[%s1 + $0x388] sm:$0xff]
  %v156 = vld [vmem:[%s1 + $0x390] sm:$0xff]
  %v157 = vld [vmem:[%s1 + $0x398] sm:$0xff]
  %v158 = vld [vmem:[%s1 + $0x3a0] sm:$0xff]
  %v159 = vld [vmem:[%s1 + $0x3a8] sm:$0xff]
  %v160 = vld [vmem:[%s1 + $0x3b0] sm:$0xff]
  %v161 = vld [vmem:[%s1 + $0x3b8] sm:$0xff]
  %v162 = vld [vmem:[%s1 + $0x3c0] sm:$0xff]
  %v163 = vld [vmem:[%s1 + $0x3c8] sm:$0xff]
  %v164 = vld [vmem:[%s1 + $0x3d0] sm:$0xff]
  %v165 = vld [vmem:[%s1 + $0x3d8] sm:$0xff]
  %v166 = vld [vmem:[%s1 + $0x3e0] sm:$0xff]
  %v167 = vld [vmem:[%s1 + $0x3e8] sm:$0xff]
  %v168 = vld [vmem:[%s1 + $0x3f0] sm:$0xff]
  %v169 = vld [vmem:[%s1 + $0x3f8] sm:$0xff]
  %v170 = vld [vmem:[%s1 + $0x400] sm:$0xff]
  %v171 = vld [vmem:[%s1 + $0x408] sm:$0xff]
  %v172 = vld [vmem:[%s1 + $0x410] sm:$0xff]
  %v173 = vld [vmem:[%s1 + $0x418] sm:$0xff]
  %v174 = vld [vmem:[%s1 + $0x420] sm:$0xff]
  %v175 = vld [vmem:[%s1 + $0x428] sm:$0xff]
  %v176 = vld [vmem:[%s1 + $0x430] sm:$0xff]
  %v177 = vld [vmem:[%s1 + $0x438] sm:$0xff]
  %v178 = vld [vmem:[%s1 + $0x440] sm:$0xff]
  %v179 = vld [vmem:[%s1 + $0x448] sm:$0xff]
  %v180 = vld [vmem:[%s1 + $0x450] sm:$0xff]
  %v181 = vld [vmem:[%s1 + $0x458] sm:$0xff]
  %v182 = vld [vmem:[%s1 + $0x460] sm:$0xff]
  %v183 = vld [vmem:[%s1 + $0x468] sm:$0xff]
  %v184 = vld [vmem:[%s1 + $0x470] sm:$0xff]
  %v185 = vld [vmem:[%s1 + $0x478] sm:$0xff]
  %v186 = vld [vmem:[%s1 + $0x480] sm:$0xff]
  %v187 = vld [vmem:[%s1 + $0x488] sm:$0xff]
  %v188 = vld [vmem:[%s1 + $0x490] sm:$0xff]
  %v189 = vld [vmem:[%s1 + $0x498] sm:$0xff]
  %v190 = vld [vmem:[%s1 + $0x4a0] sm:$0xff]
  %v191 = vld [vmem:[%s1 + $0x4a8] sm:$0xff]
  %v192 = vld [vmem:[%s1 + $0x4b0] sm:$0xff]
  %v193 = vld [vmem:[%s1 + $0x4b8] sm:$0xff]
  %v194 = vld [vmem:[%s1 + $0x4c0] sm:$0xff]
  %v195 = vld [vmem:[%s1 + $0x4c8] sm:$0xff]
  %v196 = vld [vmem:[%s1 + $0x4d0] sm:$0xff]
  %v197 = vld [vmem:[%s1 + $0x4d8] sm:$0xff]
  %v198 = vld [vmem:[%s1 + $0x4e0] sm:$0xff]
  %v199 = vld [vmem:[%s1 + $0x4e8] sm:$0xff]
  %v200 = vld [vmem:[%s1 + $0x4f0] sm:$0xff]
  %v201 = vld [vmem:[%s1 + $0x4f8] sm:$0xff]
  %v202 = vld [vmem:[%s1 + $0x500] sm:$0xff]
  %v203 = vld [vmem:[%s1 + $0x508] sm:$0xff]
  %v204 = vld [vmem:[%s1 + $0x510] sm:$0xff]
  %v205 = vld [vmem:[%s1 + $0x518] sm:$0xff]
  %v206 = vld [vmem:[%s1 + $0x520] sm:$0xff]
  %v207 = vld [vmem:[%s1 + $0x528] sm:$0xff]
  %v208 = vld [vmem:[%s1 + $0x530] sm:$0xff]
  %v209 = vld [vmem:[%s1 + $0x538] sm:$0xff]
  %v210 = vld [vmem:[%s1 + $0x540] sm:$0xff]
  %v211 = vld [vmem:[%s1 + $0x548] sm:$0xff]
  %v212 = vld [vmem:[%s1 + $0x550] sm:$0xff]
  %v213 = vld [vmem:[%s1 + $0x558] sm:$0xff]
  %v214 = vld [vmem:[%s1 + $0x560] sm:$0xff]
  %v215 = vld [vmem:[%s1 + $0x568] sm:$0xff]
  %v216 = vld [vmem:[%s1 + $0x570] sm:$0xff]
  %v217 = vld [vmem:[%s1 + $0x578] sm:$0xff]
  %v218 = vld [vmem:[%s1 + $0x580] sm:$0xff]
  %v219 = vld [vmem:[%s1 + $0x588] sm:$0xff]
  %v220 = vld [vmem:[%s1 + $0x590] sm:$0xff]
  %v221 = vld [vmem:[%s1 + $0x598] sm:$0xff]
  %v222 = vld [vmem:[%s1 + $0x5a0] sm:$0xff]
  %v223 = vld [vmem:[%s1 + $0x5a8] sm:$0xff]
  %v224 = vld [vmem:[%s1 + $0x5b0] sm:$0xff]
  %v225 = vld [vmem:[%s1 + $0x5b8] sm:$0xff]
  %v226 = vld [vmem:[%s1 + $0x5c0] sm:$0xff]
  %v227 = vld [vmem:[%s1 + $0x5c8] sm:$0xff]
  %v228 = vld [vmem:[%s1 + $0x5d0] sm:$0xff]
  %v229 = vld [vmem:[%s1 + $0x5d8] sm:$0xff]
  %v230 = vld [vmem:[%s1 + $0x5e0] sm:$0xff]
  %v231 = vld [vmem:[%s1 + $0x5e8] sm:$0xff]
  %v232 = vld [vmem:[%s1 + $0x5f0] sm:$0xff]
  %v233 = vld [vmem:[%s1 + $0x5f8] sm:$0xff]
  %v234 = vld [vmem:[%s1 + $0x600] sm:$0xff]
  %v235 = vld [vmem:[%s1 + $0x608] sm:$0xff]
  %v236 = vld [vmem:[%s1 + $0x610] sm:$0xff]
  %v237 = vld [vmem:[%s1 + $0x618] sm:$0xff]
  %v238 = vld [vmem:[%s1 + $0x620] sm:$0xff]
  %v239 = vld [vmem:[%s1 + $0x628] sm:$0xff]
  %v240 = vld [vmem:[%s1 + $0x630] sm:$0xff]
  %v241 = vld [vmem:[%s1 + $0x638] sm:$0xff]
  %v242 = vld [vmem:[%s1 + $0x640] sm:$0xff]
  %v243 = vld [vmem:[%s1 + $0x648] sm:$0xff]
  %v244 = vld [vmem:[%s1 + $0x650] sm:$0xff]
  %v245 = vld [vmem:[%s1 + $0x658] sm:$0xff]
  %v246 = vld [vmem:[%s1 + $0x660] sm:$0xff]
  %v247 = vld [vmem:[%s1 + $0x668] sm:$0xff]
  %v248 = vld [vmem:[%s1 + $0x670] sm:$0xff]
  %v249 = vld [vmem:[%s1 + $0x678] sm:$0xff]
  %v250 = vld [vmem:[%s1 + $0x680] sm:$0xff]
  %v251 = vld [vmem:[%s1 + $0x688] sm:$0xff]
  %v252 = vld [vmem:[%s1 + $0x690] sm:$0xff]
  %v253 = vld [vmem:[%s1 + $0x698] sm:$0xff]
  %v254 = vld [vmem:[%s1 + $0x6a0] sm:$0xff]
  %v255 = vld [vmem:[%s1 + $0x6a8] sm:$0xff]
  %v256 = vld [vmem:[%s1 + $0x6b0] sm:$0xff]
  %v257 = vld [vmem:[%s1 + $0x6b8] sm:$0xff]
  %v258 = vld [vmem:[%s1 + $0x6c0] sm:$0xff]
  %v259 = vld [vmem:[%s1 + $0x6c8] sm:$0xff]
  %v260 = vld [vmem:[%s1 + $0x6d0] sm:$0xff]
  %v261 = vld [vmem:[%s1 + $0x6d8] sm:$0xff]
  %v262 = vld [vmem:[%s1 + $0x6e0] sm:$0xff]
  %v263 = vld [vmem:[%s1 + $0x6e8] sm:$0xff]
  %v264 = vld [vmem:[%s1 + $0x6f0] sm:$0xff]
  %v265 = vld [vmem:[%s1 + $0x6f8] sm:$0xff]
  %v266 = vld [vmem:[%s1 + $0x700] sm:$0xff]
  %v267 = vld [vmem:[%s1 + $0x708] sm:$0xff]
  %v268 = vld [vmem:[%s1 + $0x710] sm:$0xff]
  %v269 = vld [vmem:[%s1 + $0x718] sm:$0xff]
  %v270 = vld [vmem:[%s1 + $0x720] sm:$0xff]
  %v271 = vld [vmem:[%s1 + $0x728] sm:$0xff]
  %v272 = vld [vmem:[%s1 + $0x730] sm:$0xff]
  %v273 = vld [vmem:[%s1 + $0x738] sm:$0xff]
  %v274 = vld [vmem:[%s1 + $0x740] sm:$0xff]
  %v275 = vld [vmem:[%s1 + $0x748] sm:$0xff]
  %v276 = vld [vmem:[%s1 + $0x750] sm:$0xff]
  %v277 = vld [vmem:[%s1 + $0x758] sm:$0xff]
  %v278 = vld [vmem:[%s1 + $0x760] sm:$0xff]
  %v279 = vld [vmem:[%s1 + $0x768] sm:$0xff]
  %v280 = vld [vmem:[%s1 + $0x770] sm:$0xff]
  %v281 = vld [vmem:[%s1 + $0x778] sm:$0xff]
  %v282 = vld [vmem:[%s1 + $0x780] sm:$0xff]
  %v283 = vld [vmem:[%s1 + $0x788] sm:$0xff]
  %v284 = vld [vmem:[%s1 + $0x790] sm:$0xff]
  %v285 = vld [vmem:[%s1 + $0x798] sm:$0xff]
  %v286 = vld [vmem:[%s1 + $0x7a0] sm:$0xff]
  %v287 = vld [vmem:[%s1 + $0x7a8] sm:$0xff]
  %v288 = vld [vmem:[%s1 + $0x7b0] sm:$0xff]
  %v289 = vld [vmem:[%s1 + $0x7b8] sm:$0xff]
  %v290 = vld [vmem:[%s1 + $0x7c0] sm:$0xff]
  %v291 = vld [vmem:[%s1 + $0x7c8] sm:$0xff]
  %v292 = vld [vmem:[%s1 + $0x7d0] sm:$0xff]
  %v293 = vld [vmem:[%s1 + $0x7d8] sm:$0xff]
  %v294 = vld [vmem:[%s1 + $0x7e0] sm:$0xff]
  %v295 = vld [vmem:[%s1 + $0x7e8] sm:$0xff]
  %v296 = vld [vmem:[%s1 + $0x7f0] sm:$0xff]
  %v297 = vld [vmem:[%s1 + $0x7f8] sm:$0xff]
  %v298 = vld [vmem:[%s1 + $0x800] sm:$0xff]
  %v299 = vld [vmem:[%s1 + $0x808] sm:$0xff]
  %v300 = vld [vmem:[%s1 + $0x810] sm:$0xff]
  %v301 = vld [vmem:[%s1 + $0x818] sm:$0xff]
  %v302 = vld [vmem:[%s1 + $0x820] sm:$0xff]
  %v303 = vld [vmem:[%s1 + $0x828] sm:$0xff]
  %v304 = vld [vmem:[%s1 + $0x830] sm:$0xff]
  %v305 = vld [vmem:[%s1 + $0x838] sm:$0xff]
  %v306 = vld [vmem:[%s1 + $0x840] sm:$0xff]
  %v307 = vld [vmem:[%s1 + $0x848] sm:$0xff]
  %v308 = vld [vmem:[%s1 + $0x850] sm:$0xff]
  %v309 = vld [vmem:[%s1 + $0x858] sm:$0xff]
  %v310 = vld [vmem:[%s1 + $0x860] sm:$0xff]
  %v311 = vld [vmem:[%s1 + $0x868] sm:$0xff]
  %v312 = vld [vmem:[%s1 + $0x870] sm:$0xff]
  %v313 = vld [vmem:[%s1 + $0x878] sm:$0xff]
  %v314 = vld [vmem:[%s1 + $0x880] sm:$0xff]
  %v315 = vld [vmem:[%s1 + $0x888] sm:$0xff]
  %v316 = vld [vmem:[%s1 + $0x890] sm:$0xff]
  %v317 = vld [vmem:[%s1 + $0x898] sm:$0xff]
  %v318 = vld [vmem:[%s1 + $0x8a0] sm:$0xff]
  %v319 = vld [vmem:[%s1 + $0x8a8] sm:$0xff]
  %v320 = vld [vmem:[%s1 + $0x8b0] sm:$0xff]
  %v321 = vld [vmem:[%s1 + $0x8b8] sm:$0xff]
  %v322 = vld [vmem:[%s1 + $0x8c0] sm:$0xff]
  %v323 = vld [vmem:[%s1 + $0x8c8] sm:$0xff]
  %v324 = vld [vmem:[%s1 + $0x8d0] sm:$0xff]
  %v325 = vld [vmem:[%s1 + $0x8d8] sm:$0xff]
  %v326 = vld [vmem:[%s1 + $0x8e0] sm:$0xff]
  %v327 = vld [vmem:[%s1 + $0x8e8] sm:$0xff]
  %v328 = vld [vmem:[%s1 + $0x8f0] sm:$0xff]
  %v329 = vld [vmem:[%s1 + $0x8f8] sm:$0xff]
  %v330 = vld [vmem:[%s1 + $0x900] sm:$0xff]
  %v331 = vld [vmem:[%s1 + $0x908] sm:$0xff]
  %v332 = vld [vmem:[%s1 + $0x910] sm:$0xff]
  %v333 = vld [vmem:[%s1 + $0x918] sm:$0xff]
  %v334 = vld [vmem:[%s1 + $0x920] sm:$0xff]
  %v335 = vld [vmem:[%s1 + $0x928] sm:$0xff]
  %v336 = vld [vmem:[%s1 + $0x930] sm:$0xff]
  %v337 = vld [vmem:[%s1 + $0x938] sm:$0xff]
  %v338 = vld [vmem:[%s1 + $0x940] sm:$0xff]
  %v339 = vld [vmem:[%s1 + $0x948] sm:$0xff]
  %v340 = vld [vmem:[%s1 + $0x950] sm:$0xff]
  %v341 = vld [vmem:[%s1 + $0x958] sm:$0xff]
  %v342 = vld [vmem:[%s1 + $0x960] sm:$0xff]
  %v343 = vld [vmem:[%s1 + $0x968] sm:$0xff]
  %v344 = vld [vmem:[%s1 + $0x970] sm:$0xff]
  %v345 = vld [vmem:[%s1 + $0x978] sm:$0xff]
  %v346 = vld [vmem:[%s1 + $0x980] sm:$0xff]
  %v347 = vld [vmem:[%s1 + $0x988] sm:$0xff]
  %v348 = vld [vmem:[%s1 + $0x990] sm:$0xff]
  %v349 = vld [vmem:[%s1 + $0x998] sm:$0xff]
  %v350 = vld [vmem:[%s1 + $0x9a0] sm:$0xff]
  %v351 = vld [vmem:[%s1 + $0x9a8] sm:$0xff]
  %v352 = vld [vmem:[%s1 + $0x9b0] sm:$0xff]
  %v353 = vld [vmem:[%s1 + $0x9b8] sm:$0xff]
  %v354 = vld [vmem:[%s1 + $0x9c0] sm:$0xff]
  %v355 = vld [vmem:[%s1 + $0x9c8] sm:$0xff]
  %v356 = vld [vmem:[%s1 + $0x9d0] sm:$0xff]
  %v357 = vld [vmem:[%s1 + $0x9d8] sm:$0xff]
  %v358 = vld [vmem:[%s1 + $0x9e0] sm:$0xff]
  %v359 = vld [vmem:[%s1 + $0x9e8] sm:$0xff]
  %v360 = vld [vmem:[%s1 + $0x9f0] sm:$0xff]
  %v361 = vld [vmem:[%s1 + $0x9f8] sm:$0xff]
  %v362 = vld [vmem:[%s1 + $0xa00] sm:$0xff]
  %v363 = vld [vmem:[%s1 + $0xa08] sm:$0xff]
  %v364 = vld [vmem:[%s1 + $0xa10] sm:$0xff]
  %v365 = vld [vmem:[%s1 + $0xa18] sm:$0xff]
  %v366 = vld [vmem:[%s1 + $0xa20] sm:$0xff]
  %v367 = vld [vmem:[%s1 + $0xa28] sm:$0xff]
  %v368 = vld [vmem:[%s1 + $0xa30] sm:$0xff]
  %v369 = vld [vmem:[%s1 + $0xa38] sm:$0xff]
  %v370 = vld [vmem:[%s1 + $0xa40] sm:$0xff]
  %v371 = vld [vmem:[%s1 + $0xa48] sm:$0xff]
  %v372 = vld [vmem:[%s1 + $0xa50] sm:$0xff]
  %v373 = vld [vmem:[%s1 + $0xa58] sm:$0xff]
  %v374 = vld [vmem:[%s1 + $0xa60] sm:$0xff]
  %v375 = vld [vmem:[%s1 + $0xa68] sm:$0xff]
  %v376 = vld [vmem:[%s1 + $0xa70] sm:$0xff]
  %v377 = vld [vmem:[%s1 + $0xa78] sm:$0xff]
  %v378 = vld [vmem:[%s1 + $0xa80] sm:$0xff]
  %v379 = vld [vmem:[%s1 + $0xa88] sm:$0xff]
  %v380 = vld [vmem:[%s1 + $0xa90] sm:$0xff]
  %v381 = vld [vmem:[%s1 + $0xa98] sm:$0xff]
  %v382 = vld [vmem:[%s1 + $0xaa0] sm:$0xff]
  %v383 = vld [vmem:[%s1 + $0xaa8] sm:$0xff]
  %v384 = vld [vmem:[%s1 + $0xab0] sm:$0xff]
  %v385 = vld [vmem:[%s1 + $0xab8] sm:$0xff]
  %v386 = vld [vmem:[%s1 + $0xac0] sm:$0xff]
  %v387 = vld [vmem:[%s1 + $0xac8] sm:$0xff]
  %v388 = vld [vmem:[%s1 + $0xad0] sm:$0xff]
  %v389 = vld [vmem:[%s1 + $0xad8] sm:$0xff]
  %v390 = vld [vmem:[%s1 + $0xae0] sm:$0xff]
  %v391 = vld [vmem:[%s1 + $0xae8] sm:$0xff]
  %v392 = vld [vmem:[%s1 + $0xaf0] sm:$0xff]
  %v393 = vld [vmem:[%s1 + $0xaf8] sm:$0xff]
  %v394 = vld [vmem:[%s1 + $0xb00] sm:$0xff]
  %v395 = vld [vmem:[%s1 + $0xb08] sm:$0xff]
  %v396 = vld [vmem:[%s1 + $0xb10] sm:$0xff]
  %v397 = vld [vmem:[%s1 + $0xb18] sm:$0xff]
  %v398 = vld [vmem:[%s1 + $0xb20] sm:$0xff]
  %v399 = vld [vmem:[%s1 + $0xb28] sm:$0xff]
  %v400 = vld [vmem:[%s1 + $0xb30] sm:$0xff]
  %v401 = vld [vmem:[%s1 + $0xb38] sm:$0xff]
  %v402 = vld [vmem:[%s1 + $0xb40] sm:$0xff]
  %v403 = vld [vmem:[%s1 + $0xb48] sm:$0xff]
  %v404 = vld [vmem:[%s1 + $0xb50] sm:$0xff]
  %v405 = vld [vmem:[%s1 + $0xb58] sm:$0xff]
  %v406 = vld [vmem:[%s1 + $0xb60] sm:$0xff]
  %v407 = vld [vmem:[%s1 + $0xb68] sm:$0xff]
  %v408 = vld [vmem:[%s1 + $0xb70] sm:$0xff]
  %v409 = vld [vmem:[%s1 + $0xb78] sm:$0xff]
  %v410 = vld [vmem:[%s1 + $0xb80] sm:$0xff]
  %v411 = vld [vmem:[%s1 + $0xb88] sm:$0xff]
  %v412 = vld [vmem:[%s1 + $0xb90] sm:$0xff]
  %v413 = vld [vmem:[%s1 + $0xb98] sm:$0xff]
  %v414 = vld [vmem:[%s1 + $0xba0] sm:$0xff]
  %v415 = vld [vmem:[%s1 + $0xba8] sm:$0xff]
  %v416 = vld [vmem:[%s1 + $0xbb0] sm:$0xff]
  %v417 = vld [vmem:[%s1 + $0xbb8] sm:$0xff]
  %v418 = vld [vmem:[%s1 + $0xbc0] sm:$0xff]
  %v419 = vld [vmem:[%s1 + $0xbc8] sm:$0xff]
  %v420 = vld [vmem:[%s1 + $0xbd0] sm:$0xff]
  %v421 = vld [vmem:[%s1 + $0xbd8] sm:$0xff]
  %v422 = vld [vmem:[%s1 + $0xbe0] sm:$0xff]
  %v423 = vld [vmem:[%s1 + $0xbe8] sm:$0xff]
  %v424 = vld [vmem:[%s1 + $0xbf0] sm:$0xff]
  %v425 = vld [vmem:[%s1 + $0xbf8] sm:$0xff]
  %v426 = vld [vmem:[%s1 + $0xc00] sm:$0xff]
  %v427 = vld [vmem:[%s1 + $0xc08] sm:$0xff]
  %v428 = vld [vmem:[%s1 + $0xc10] sm:$0xff]
  %v429 = vld [vmem:[%s1 + $0xc18] sm:$0xff]
  %v430 = vld [vmem:[%s1 + $0xc20] sm:$0xff]
  %v431 = vld [vmem:[%s1 + $0xc28] sm:$0xff]
  %v432 = vld [vmem:[%s1 + $0xc30] sm:$0xff]
  %v433 = vld [vmem:[%s1 + $0xc38] sm:$0xff]
  %v434 = vld [vmem:[%s1 + $0xc40] sm:$0xff]
  %v435 = vld [vmem:[%s1 + $0xc48] sm:$0xff]
  %v436 = vld [vmem:[%s1 + $0xc50] sm:$0xff]
  %v437 = vld [vmem:[%s1 + $0xc58] sm:$0xff]
  %v438 = vld [vmem:[%s1 + $0xc60] sm:$0xff]
  %v439 = vld [vmem:[%s1 + $0xc68] sm:$0xff]
  %v440 = vld [vmem:[%s1 + $0xc70] sm:$0xff]
  %v441 = vld [vmem:[%s1 + $0xc78] sm:$0xff]
  %v442 = vld [vmem:[%s1 + $0xc80] sm:$0xff]
  %v443 = vld [vmem:[%s1 + $0xc88] sm:$0xff]
  %v444 = vld [vmem:[%s1 + $0xc90] sm:$0xff]
  %v445 = vld [vmem:[%s1 + $0xc98] sm:$0xff]
  %v446 = vld [vmem:[%s1 + $0xca0] sm:$0xff]
  %v447 = vld [vmem:[%s1 + $0xca8] sm:$0xff]
  %v448 = vld [vmem:[%s1 + $0xcb0] sm:$0xff]
  %v449 = vld [vmem:[%s1 + $0xcb8] sm:$0xff]
  %v450 = vld [vmem:[%s1 + $0xcc0] sm:$0xff]
  %v451 = vld [vmem:[%s1 + $0xcc8] sm:$0xff]
  %v452 = vld [vmem:[%s1 + $0xcd0] sm:$0xff]
  %v453 = vld [vmem:[%s1 + $0xcd8] sm:$0xff]
  %v454 = vld [vmem:[%s1 + $0xce0] sm:$0xff]
  %v455 = vld [vmem:[%s1 + $0xce8] sm:$0xff]
  %v456 = vld [vmem:[%s1 + $0xcf0] sm:$0xff]
  %v457 = vld [vmem:[%s1 + $0xcf8] sm:$0xff]
  %v458 = vld [vmem:[%s1 + $0xd00] sm:$0xff]
  %v459 = vld [vmem:[%s1 + $0xd08] sm:$0xff]
  %v460 = vld [vmem:[%s1 + $0xd10] sm:$0xff]
  %v461 = vld [vmem:[%s1 + $0xd18] sm:$0xff]
  %v462 = vld [vmem:[%s1 + $0xd20] sm:$0xff]
  %v463 = vld [vmem:[%s1 + $0xd28] sm:$0xff]
  %v464 = vld [vmem:[%s1 + $0xd30] sm:$0xff]
  %v465 = vld [vmem:[%s1 + $0xd38] sm:$0xff]
  %v466 = vld [vmem:[%s1 + $0xd40] sm:$0xff]
  %v467 = vld [vmem:[%s1 + $0xd48] sm:$0xff]
  %v468 = vld [vmem:[%s1 + $0xd50] sm:$0xff]
  %v469 = vld [vmem:[%s1 + $0xd58] sm:$0xff]
  %v470 = vld [vmem:[%s1 + $0xd60] sm:$0xff]
  %v471 = vld [vmem:[%s1 + $0xd68] sm:$0xff]
  %v472 = vld [vmem:[%s1 + $0xd70] sm:$0xff]
  %v473 = vld [vmem:[%s1 + $0xd78] sm:$0xff]
  %v474 = vld [vmem:[%s1 + $0xd80] sm:$0xff]
  %v475 = vld [vmem:[%s1 + $0xd88] sm:$0xff]
  %v476 = vld [vmem:[%s1 + $0xd90] sm:$0xff]
  %v477 = vld [vmem:[%s1 + $0xd98] sm:$0xff]
  %v478 = vld [vmem:[%s1 + $0xda0] sm:$0xff]
  %v479 = vld [vmem:[%s1 + $0xda8] sm:$0xff]
  %v480 = vld [vmem:[%s1 + $0xdb0] sm:$0xff]
  %v481 = vld [vmem:[%s1 + $0xdb8] sm:$0xff]
  %v482 = vld [vmem:[%s1 + $0xdc0] sm:$0xff]
  %v483 = vld [vmem:[%s1 + $0xdc8] sm:$0xff]
  %v484 = vld [vmem:[%s1 + $0xdd0] sm:$0xff]
  %v485 = vld [vmem:[%s1 + $0xdd8] sm:$0xff]
  %v486 = vld [vmem:[%s1 + $0xde0] sm:$0xff]
  %v487 = vld [vmem:[%s1 + $0xde8] sm:$0xff]
  %v488 = vld [vmem:[%s1 + $0xdf0] sm:$0xff]
  %v489 = vld [vmem:[%s1 + $0xdf8] sm:$0xff]
  %490 = vmatpush.msra.mxu0 %v72
  %491 = vmatpush.msra.mxu0 %v70
  %492 = vmatpush.msra.mxu0 %v68
  %493 = vmatpush.msra.mxu0 %v66
  %494 = vmatpush.msra.mxu0 %v64
  %495 = vmatpush.msra.mxu0 %v62
  %496 = vmatpush.msra.mxu0 %v60
  %497 = vmatpush.msra.mxu0 %v58
  %498 = vmatpush.msra.mxu0 %v56
  %499 = vmatpush.msra.mxu0 %v54
  %500 = vmatpush.msra.mxu0 %v52
  %501 = vmatpush.msra.mxu0 %v50
  %502 = vmatpush.msra.mxu0 %v48
  %503 = vmatpush.msra.mxu0 %v46
  %504 = vmatpush.msra.mxu0 %v44
  %505 = vmatpush.msra.mxu0 %v42
  %506 = vmatmul.f32.gmra.mxu0 %v14
  %v507 = vpop.f32.mrf.mxu0
  %v508 = vadd.f32 0.0, %v507
  %509 = vmatmul.f32.gmra.mxu0 %v28
  %v510 = vpop.f32.mrf.mxu0
  %v511 = vadd.f32 0.0, %v510
  %512 = vdwg.mxu0
  %513 = vmatpush.msra.mxu0 %v104
  %514 = vmatpush.msra.mxu0 %v102
  %515 = vmatpush.msra.mxu0 %v100
  %516 = vmatpush.msra.mxu0 %v98
  %517 = vmatpush.msra.mxu0 %v96
  %518 = vmatpush.msra.mxu0 %v94
  %519 = vmatpush.msra.mxu0 %v92
  %520 = vmatpush.msra.mxu0 %v90
  %521 = vmatpush.msra.mxu0 %v88
  %522 = vmatpush.msra.mxu0 %v86
  %523 = vmatpush.msra.mxu0 %v84
  %524 = vmatpush.msra.mxu0 %v82
  %525 = vmatpush.msra.mxu0 %v80
  %526 = vmatpush.msra.mxu0 %v78
  %527 = vmatpush.msra.mxu0 %v76
  %528 = vmatpush.msra.mxu0 %v74
  %529 = vmatmul.f32.gmra.mxu0 %v15
  %v530 = vpop.f32.mrf.mxu0
  %v531 = vadd.f32 %v508, %v530
  %532 = vmatmul.f32.gmra.mxu0 %v29
  %v533 = vpop.f32.mrf.mxu0
  %v534 = vadd.f32 %v511, %v533
  %535 = vdwg.mxu0
  %536 = vmatpush.msra.mxu0 %v136
  %537 = vmatpush.msra.mxu0 %v134
  %538 = vmatpush.msra.mxu0 %v132
  %539 = vmatpush.msra.mxu0 %v130
  %540 = vmatpush.msra.mxu0 %v128
  %541 = vmatpush.msra.mxu0 %v126
  %542 = vmatpush.msra.mxu0 %v124
  %543 = vmatpush.msra.mxu0 %v122
  %544 = vmatpush.msra.mxu0 %v120
  %545 = vmatpush.msra.mxu0 %v118
  %546 = vmatpush.msra.mxu0 %v116
  %547 = vmatpush.msra.mxu0 %v114
  %548 = vmatpush.msra.mxu0 %v112
  %549 = vmatpush.msra.mxu0 %v110
  %550 = vmatpush.msra.mxu0 %v108
  %551 = vmatpush.msra.mxu0 %v106
  %552 = vmatmul.f32.gmra.mxu0 %v16
  %v553 = vpop.f32.mrf.mxu0
  %v554 = vadd.f32 %v531, %v553
  %555 = vmatmul.f32.gmra.mxu0 %v30
  %v556 = vpop.f32.mrf.mxu0
  %v557 = vadd.f32 %v534, %v556
  %558 = vdwg.mxu0
  %559 = vmatpush.msra.mxu0 %v168
  %560 = vmatpush.msra.mxu0 %v166
  %561 = vmatpush.msra.mxu0 %v164
  %562 = vmatpush.msra.mxu0 %v162
  %563 = vmatpush.msra.mxu0 %v160
  %564 = vmatpush.msra.mxu0 %v158
  %565 = vmatpush.msra.mxu0 %v156
  %566 = vmatpush.msra.mxu0 %v154
  %567 = vmatpush.msra.mxu0 %v152
  %568 = vmatpush.msra.mxu0 %v150
  %569 = vmatpush.msra.mxu0 %v148
  %570 = vmatpush.msra.mxu0 %v146
  %571 = vmatpush.msra.mxu0 %v144
  %572 = vmatpush.msra.mxu0 %v142
  %573 = vmatpush.msra.mxu0 %v140
  %574 = vmatpush.msra.mxu0 %v138
  %575 = vmatmul.f32.gmra.mxu0 %v17
  %v576 = vpop.f32.mrf.mxu0
  %v577 = vadd.f32 %v554, %v576
  %578 = vmatmul.f32.gmra.mxu0 %v31
  %v579 = vpop.f32.mrf.mxu0
  %v580 = vadd.f32 %v557, %v579
  %581 = vdwg.mxu0
  %582 = vmatpush.msra.mxu0 %v200
  %583 = vmatpush.msra.mxu0 %v198
  %584 = vmatpush.msra.mxu0 %v196
  %585 = vmatpush.msra.mxu0 %v194
  %586 = vmatpush.msra.mxu0 %v192
  %587 = vmatpush.msra.mxu0 %v190
  %588 = vmatpush.msra.mxu0 %v188
  %589 = vmatpush.msra.mxu0 %v186
  %590 = vmatpush.msra.mxu0 %v184
  %591 = vmatpush.msra.mxu0 %v182
  %592 = vmatpush.msra.mxu0 %v180
  %593 = vmatpush.msra.mxu0 %v178
  %594 = vmatpush.msra.mxu0 %v176
  %595 = vmatpush.msra.mxu0 %v174
  %596 = vmatpush.msra.mxu0 %v172
  %597 = vmatpush.msra.mxu0 %v170
  %598 = vmatmul.f32.gmra.mxu0 %v18
  %v599 = vpop.f32.mrf.mxu0
  %v600 = vadd.f32 %v577, %v599
  %601 = vmatmul.f32.gmra.mxu0 %v32
  %v602 = vpop.f32.mrf.mxu0
  %v603 = vadd.f32 %v580, %v602
  %604 = vdwg.mxu0
  %605 = vmatpush.msra.mxu0 %v232
  %606 = vmatpush.msra.mxu0 %v230
  %607 = vmatpush.msra.mxu0 %v228
  %608 = vmatpush.msra.mxu0 %v226
  %609 = vmatpush.msra.mxu0 %v224
  %610 = vmatpush.msra.mxu0 %v222
  %611 = vmatpush.msra.mxu0 %v220
  %612 = vmatpush.msra.mxu0 %v218
  %613 = vmatpush.msra.mxu0 %v216
  %614 = vmatpush.msra.mxu0 %v214
  %615 = vmatpush.msra.mxu0 %v212
  %616 = vmatpush.msra.mxu0 %v210
  %617 = vmatpush.msra.mxu0 %v208
  %618 = vmatpush.msra.mxu0 %v206
  %619 = vmatpush.msra.mxu0 %v204
  %620 = vmatpush.msra.mxu0 %v202
  %621 = vmatmul.f32.gmra.mxu0 %v19
  %v622 = vpop.f32.mrf.mxu0
  %v623 = vadd.f32 %v600, %v622
  %624 = vmatmul.f32.gmra.mxu0 %v33
  %v625 = vpop.f32.mrf.mxu0
  %v626 = vadd.f32 %v603, %v625
  %627 = vdwg.mxu0
  %628 = vmatpush.msra.mxu0 %v264
  %629 = vmatpush.msra.mxu0 %v262
  %630 = vmatpush.msra.mxu0 %v260
  %631 = vmatpush.msra.mxu0 %v258
  %632 = vmatpush.msra.mxu0 %v256
  %633 = vmatpush.msra.mxu0 %v254
  %634 = vmatpush.msra.mxu0 %v252
  %635 = vmatpush.msra.mxu0 %v250
  %636 = vmatpush.msra.mxu0 %v248
  %637 = vmatpush.msra.mxu0 %v246
  %638 = vmatpush.msra.mxu0 %v244
  %639 = vmatpush.msra.mxu0 %v242
  %640 = vmatpush.msra.mxu0 %v240
  %641 = vmatpush.msra.mxu0 %v238
  %642 = vmatpush.msra.mxu0 %v236
  %643 = vmatpush.msra.mxu0 %v234
  %644 = vmatmul.f32.gmra.mxu0 %v20
  %v645 = vpop.f32.mrf.mxu0
  %v646 = vadd.f32 %v623, %v645
  %647 = vmatmul.f32.gmra.mxu0 %v34
  %v648 = vpop.f32.mrf.mxu0
  %v649 = vadd.f32 %v626, %v648
  %650 = vdwg.mxu0
  %651 = vmatpush.msra.mxu0 %v296
  %652 = vmatpush.msra.mxu0 %v294
  %653 = vmatpush.msra.mxu0 %v292
  %654 = vmatpush.msra.mxu0 %v290
  %655 = vmatpush.msra.mxu0 %v288
  %656 = vmatpush.msra.mxu0 %v286
  %657 = vmatpush.msra.mxu0 %v284
  %658 = vmatpush.msra.mxu0 %v282
  %659 = vmatpush.msra.mxu0 %v280
  %660 = vmatpush.msra.mxu0 %v278
  %661 = vmatpush.msra.mxu0 %v276
  %662 = vmatpush.msra.mxu0 %v274
  %663 = vmatpush.msra.mxu0 %v272
  %664 = vmatpush.msra.mxu0 %v270
  %665 = vmatpush.msra.mxu0 %v268
  %666 = vmatpush.msra.mxu0 %v266
  %667 = vmatmul.f32.gmra.mxu0 %v21
  %v668 = vpop.f32.mrf.mxu0
  %v669 = vadd.f32 %v646, %v668
  %670 = vmatmul.f32.gmra.mxu0 %v35
  %v671 = vpop.f32.mrf.mxu0
  %v672 = vadd.f32 %v649, %v671
  %673 = vdwg.mxu0
  %674 = vmatpush.msra.mxu0 %v328
  %675 = vmatpush.msra.mxu0 %v326
  %676 = vmatpush.msra.mxu0 %v324
  %677 = vmatpush.msra.mxu0 %v322
  %678 = vmatpush.msra.mxu0 %v320
  %679 = vmatpush.msra.mxu0 %v318
  %680 = vmatpush.msra.mxu0 %v316
  %681 = vmatpush.msra.mxu0 %v314
  %682 = vmatpush.msra.mxu0 %v312
  %683 = vmatpush.msra.mxu0 %v310
  %684 = vmatpush.msra.mxu0 %v308
  %685 = vmatpush.msra.mxu0 %v306
  %686 = vmatpush.msra.mxu0 %v304
  %687 = vmatpush.msra.mxu0 %v302
  %688 = vmatpush.msra.mxu0 %v300
  %689 = vmatpush.msra.mxu0 %v298
  %690 = vmatmul.f32.gmra.mxu0 %v22
  %v691 = vpop.f32.mrf.mxu0
  %v692 = vadd.f32 %v669, %v691
  %693 = vmatmul.f32.gmra.mxu0 %v36
  %v694 = vpop.f32.mrf.mxu0
  %v695 = vadd.f32 %v672, %v694
  %696 = vdwg.mxu0
  %697 = vmatpush.msra.mxu0 %v360
  %698 = vmatpush.msra.mxu0 %v358
  %699 = vmatpush.msra.mxu0 %v356
  %700 = vmatpush.msra.mxu0 %v354
  %701 = vmatpush.msra.mxu0 %v352
  %702 = vmatpush.msra.mxu0 %v350
  %703 = vmatpush.msra.mxu0 %v348
  %704 = vmatpush.msra.mxu0 %v346
  %705 = vmatpush.msra.mxu0 %v344
  %706 = vmatpush.msra.mxu0 %v342
  %707 = vmatpush.msra.mxu0 %v340
  %708 = vmatpush.msra.mxu0 %v338
  %709 = vmatpush.msra.mxu0 %v336
  %710 = vmatpush.msra.mxu0 %v334
  %711 = vmatpush.msra.mxu0 %v332
  %712 = vmatpush.msra.mxu0 %v330
  %713 = vmatmul.f32.gmra.mxu0 %v23
  %v714 = vpop.f32.mrf.mxu0
  %v715 = vadd.f32 %v692, %v714
  %716 = vmatmul.f32.gmra.mxu0 %v37
  %v717 = vpop.f32.mrf.mxu0
  %v718 = vadd.f32 %v695, %v717
  %719 = vdwg.mxu0
  %720 = vmatpush.msra.mxu0 %v392
  %721 = vmatpush.msra.mxu0 %v390
  %722 = vmatpush.msra.mxu0 %v388
  %723 = vmatpush.msra.mxu0 %v386
  %724 = vmatpush.msra.mxu0 %v384
  %725 = vmatpush.msra.mxu0 %v382
  %726 = vmatpush.msra.mxu0 %v380
  %727 = vmatpush.msra.mxu0 %v378
  %728 = vmatpush.msra.mxu0 %v376
  %729 = vmatpush.msra.mxu0 %v374
  %730 = vmatpush.msra.mxu0 %v372
  %731 = vmatpush.msra.mxu0 %v370
  %732 = vmatpush.msra.mxu0 %v368
  %733 = vmatpush.msra.mxu0 %v366
  %734 = vmatpush.msra.mxu0 %v364
  %735 = vmatpush.msra.mxu0 %v362
  %736 = vmatmul.f32.gmra.mxu0 %v24
  %v737 = vpop.f32.mrf.mxu0
  %v738 = vadd.f32 %v715, %v737
  %739 = vmatmul.f32.gmra.mxu0 %v38
  %v740 = vpop.f32.mrf.mxu0
  %v741 = vadd.f32 %v718, %v740
  %742 = vdwg.mxu0
  %743 = vmatpush.msra.mxu0 %v424
  %744 = vmatpush.msra.mxu0 %v422
  %745 = vmatpush.msra.mxu0 %v420
  %746 = vmatpush.msra.mxu0 %v418
  %747 = vmatpush.msra.mxu0 %v416
  %748 = vmatpush.msra.mxu0 %v414
  %749 = vmatpush.msra.mxu0 %v412
  %750 = vmatpush.msra.mxu0 %v410
  %751 = vmatpush.msra.mxu0 %v408
  %752 = vmatpush.msra.mxu0 %v406
  %753 = vmatpush.msra.mxu0 %v404
  %754 = vmatpush.msra.mxu0 %v402
  %755 = vmatpush.msra.mxu0 %v400
  %756 = vmatpush.msra.mxu0 %v398
  %757 = vmatpush.msra.mxu0 %v396
  %758 = vmatpush.msra.mxu0 %v394
  %759 = vmatmul.f32.gmra.mxu0 %v25
  %v760 = vpop.f32.mrf.mxu0
  %v761 = vadd.f32 %v738, %v760
  %762 = vmatmul.f32.gmra.mxu0 %v39
  %v763 = vpop.f32.mrf.mxu0
  %v764 = vadd.f32 %v741, %v763
  %765 = vdwg.mxu0
  %766 = vmatpush.msra.mxu0 %v456
  %767 = vmatpush.msra.mxu0 %v454
  %768 = vmatpush.msra.mxu0 %v452
  %769 = vmatpush.msra.mxu0 %v450
  %770 = vmatpush.msra.mxu0 %v448
  %771 = vmatpush.msra.mxu0 %v446
  %772 = vmatpush.msra.mxu0 %v444
  %773 = vmatpush.msra.mxu0 %v442
  %774 = vmatpush.msra.mxu0 %v440
  %775 = vmatpush.msra.mxu0 %v438
  %776 = vmatpush.msra.mxu0 %v436
  %777 = vmatpush.msra.mxu0 %v434
  %778 = vmatpush.msra.mxu0 %v432
  %779 = vmatpush.msra.mxu0 %v430
  %780 = vmatpush.msra.mxu0 %v428
  %781 = vmatpush.msra.mxu0 %v426
  %782 = vmatmul.f32.gmra.mxu0 %v26
  %v783 = vpop.f32.mrf.mxu0
  %v784 = vadd.f32 %v761, %v783
  %785 = vmatmul.f32.gmra.mxu0 %v40
  %v786 = vpop.f32.mrf.mxu0
  %v787 = vadd.f32 %v764, %v786
  %788 = vdwg.mxu0
  %789 = vmatpush.msra.mxu0 %v488
  %790 = vmatpush.msra.mxu0 %v486
  %791 = vmatpush.msra.mxu0 %v484
  %792 = vmatpush.msra.mxu0 %v482
  %793 = vmatpush.msra.mxu0 %v480
  %794 = vmatpush.msra.mxu0 %v478
  %795 = vmatpush.msra.mxu0 %v476
  %796 = vmatpush.msra.mxu0 %v474
  %797 = vmatpush.msra.mxu0 %v472
  %798 = vmatpush.msra.mxu0 %v470
  %799 = vmatpush.msra.mxu0 %v468
  %800 = vmatpush.msra.mxu0 %v466
  %801 = vmatpush.msra.mxu0 %v464
  %802 = vmatpush.msra.mxu0 %v462
  %803 = vmatpush.msra.mxu0 %v460
  %804 = vmatpush.msra.mxu0 %v458
  %805 = vmatmul.f32.gmra.mxu0 %v27
  %v806 = vpop.f32.mrf.mxu0
  %v807 = vadd.f32 %v784, %v806
  %808 = vmatmul.f32.gmra.mxu0 %v41
  %v809 = vpop.f32.mrf.mxu0
  %v810 = vadd.f32 %v787, %v809
  %811 = vdwg.mxu0
  %812 = vmatpush.msra.mxu0 %v73
  %813 = vmatpush.msra.mxu0 %v71
  %814 = vmatpush.msra.mxu0 %v69
  %815 = vmatpush.msra.mxu0 %v67
  %816 = vmatpush.msra.mxu0 %v65
  %817 = vmatpush.msra.mxu0 %v63
  %818 = vmatpush.msra.mxu0 %v61
  %819 = vmatpush.msra.mxu0 %v59
  %820 = vmatpush.msra.mxu0 %v57
  %821 = vmatpush.msra.mxu0 %v55
  %822 = vmatpush.msra.mxu0 %v53
  %823 = vmatpush.msra.mxu0 %v51
  %824 = vmatpush.msra.mxu0 %v49
  %825 = vmatpush.msra.mxu0 %v47
  %826 = vmatpush.msra.mxu0 %v45
  %827 = vmatpush.msra.mxu0 %v43
  %828 = vmatmul.f32.gmra.mxu0 %v14
  %v829 = vpop.f32.mrf.mxu0
  %v830 = vadd.f32 0.0, %v829
  %831 = vmatmul.f32.gmra.mxu0 %v28
  %v832 = vpop.f32.mrf.mxu0
  %v833 = vadd.f32 0.0, %v832
  %834 = vdwg.mxu0
  %835 = vmatpush.msra.mxu0 %v105
  %836 = vmatpush.msra.mxu0 %v103
  %837 = vmatpush.msra.mxu0 %v101
  %838 = vmatpush.msra.mxu0 %v99
  %839 = vmatpush.msra.mxu0 %v97
  %840 = vmatpush.msra.mxu0 %v95
  %841 = vmatpush.msra.mxu0 %v93
  %842 = vmatpush.msra.mxu0 %v91
  %843 = vmatpush.msra.mxu0 %v89
  %844 = vmatpush.msra.mxu0 %v87
  %845 = vmatpush.msra.mxu0 %v85
  %846 = vmatpush.msra.mxu0 %v83
  %847 = vmatpush.msra.mxu0 %v81
  %848 = vmatpush.msra.mxu0 %v79
  %849 = vmatpush.msra.mxu0 %v77
  %850 = vmatpush.msra.mxu0 %v75
  %851 = vmatmul.f32.gmra.mxu0 %v15
  %v852 = vpop.f32.mrf.mxu0
  %v853 = vadd.f32 %v830, %v852
  %854 = vmatmul.f32.gmra.mxu0 %v29
  %v855 = vpop.f32.mrf.mxu0
  %v856 = vadd.f32 %v833, %v855
  %857 = vdwg.mxu0
  %858 = vmatpush.msra.mxu0 %v137
  %859 = vmatpush.msra.mxu0 %v135
  %860 = vmatpush.msra.mxu0 %v133
  %861 = vmatpush.msra.mxu0 %v131
  %862 = vmatpush.msra.mxu0 %v129
  %863 = vmatpush.msra.mxu0 %v127
  %864 = vmatpush.msra.mxu0 %v125
  %865 = vmatpush.msra.mxu0 %v123
  %866 = vmatpush.msra.mxu0 %v121
  %867 = vmatpush.msra.mxu0 %v119
  %868 = vmatpush.msra.mxu0 %v117
  %869 = vmatpush.msra.mxu0 %v115
  %870 = vmatpush.msra.mxu0 %v113
  %871 = vmatpush.msra.mxu0 %v111
  %872 = vmatpush.msra.mxu0 %v109
  %873 = vmatpush.msra.mxu0 %v107
  %874 = vmatmul.f32.gmra.mxu0 %v16
  %v875 = vpop.f32.mrf.mxu0
  %v876 = vadd.f32 %v853, %v875
  %877 = vmatmul.f32.gmra.mxu0 %v30
  %v878 = vpop.f32.mrf.mxu0
  %v879 = vadd.f32 %v856, %v878
  %880 = vdwg.mxu0
  %881 = vmatpush.msra.mxu0 %v169
  %882 = vmatpush.msra.mxu0 %v167
  %883 = vmatpush.msra.mxu0 %v165
  %884 = vmatpush.msra.mxu0 %v163
  %885 = vmatpush.msra.mxu0 %v161
  %886 = vmatpush.msra.mxu0 %v159
  %887 = vmatpush.msra.mxu0 %v157
  %888 = vmatpush.msra.mxu0 %v155
  %889 = vmatpush.msra.mxu0 %v153
  %890 = vmatpush.msra.mxu0 %v151
  %891 = vmatpush.msra.mxu0 %v149
  %892 = vmatpush.msra.mxu0 %v147
  %893 = vmatpush.msra.mxu0 %v145
  %894 = vmatpush.msra.mxu0 %v143
  %895 = vmatpush.msra.mxu0 %v141
  %896 = vmatpush.msra.mxu0 %v139
  %897 = vmatmul.f32.gmra.mxu0 %v17
  %v898 = vpop.f32.mrf.mxu0
  %v899 = vadd.f32 %v876, %v898
  %900 = vmatmul.f32.gmra.mxu0 %v31
  %v901 = vpop.f32.mrf.mxu0
  %v902 = vadd.f32 %v879, %v901
  %903 = vdwg.mxu0
  %904 = vmatpush.msra.mxu0 %v201
  %905 = vmatpush.msra.mxu0 %v199
  %906 = vmatpush.msra.mxu0 %v197
  %907 = vmatpush.msra.mxu0 %v195
  %908 = vmatpush.msra.mxu0 %v193
  %909 = vmatpush.msra.mxu0 %v191
  %910 = vmatpush.msra.mxu0 %v189
  %911 = vmatpush.msra.mxu0 %v187
  %912 = vmatpush.msra.mxu0 %v185
  %913 = vmatpush.msra.mxu0 %v183
  %914 = vmatpush.msra.mxu0 %v181
  %915 = vmatpush.msra.mxu0 %v179
  %916 = vmatpush.msra.mxu0 %v177
  %917 = vmatpush.msra.mxu0 %v175
  %918 = vmatpush.msra.mxu0 %v173
  %919 = vmatpush.msra.mxu0 %v171
  %920 = vmatmul.f32.gmra.mxu0 %v18
  %v921 = vpop.f32.mrf.mxu0
  %v922 = vadd.f32 %v899, %v921
  %923 = vmatmul.f32.gmra.mxu0 %v32
  %v924 = vpop.f32.mrf.mxu0
  %v925 = vadd.f32 %v902, %v924
  %926 = vdwg.mxu0
  %927 = vmatpush.msra.mxu0 %v233
  %928 = vmatpush.msra.mxu0 %v231
  %929 = vmatpush.msra.mxu0 %v229
  %930 = vmatpush.msra.mxu0 %v227
  %931 = vmatpush.msra.mxu0 %v225
  %932 = vmatpush.msra.mxu0 %v223
  %933 = vmatpush.msra.mxu0 %v221
  %934 = vmatpush.msra.mxu0 %v219
  %935 = vmatpush.msra.mxu0 %v217
  %936 = vmatpush.msra.mxu0 %v215
  %937 = vmatpush.msra.mxu0 %v213
  %938 = vmatpush.msra.mxu0 %v211
  %939 = vmatpush.msra.mxu0 %v209
  %940 = vmatpush.msra.mxu0 %v207
  %941 = vmatpush.msra.mxu0 %v205
  %942 = vmatpush.msra.mxu0 %v203
  %943 = vmatmul.f32.gmra.mxu0 %v19
  %v944 = vpop.f32.mrf.mxu0
  %v945 = vadd.f32 %v922, %v944
  %946 = vmatmul.f32.gmra.mxu0 %v33
  %v947 = vpop.f32.mrf.mxu0
  %v948 = vadd.f32 %v925, %v947
  %949 = vdwg.mxu0
  %950 = vmatpush.msra.mxu0 %v265
  %951 = vmatpush.msra.mxu0 %v263
  %952 = vmatpush.msra.mxu0 %v261
  %953 = vmatpush.msra.mxu0 %v259
  %954 = vmatpush.msra.mxu0 %v257
  %955 = vmatpush.msra.mxu0 %v255
  %956 = vmatpush.msra.mxu0 %v253
  %957 = vmatpush.msra.mxu0 %v251
  %958 = vmatpush.msra.mxu0 %v249
  %959 = vmatpush.msra.mxu0 %v247
  %960 = vmatpush.msra.mxu0 %v245
  %961 = vmatpush.msra.mxu0 %v243
  %962 = vmatpush.msra.mxu0 %v241
  %963 = vmatpush.msra.mxu0 %v239
  %964 = vmatpush.msra.mxu0 %v237
  %965 = vmatpush.msra.mxu0 %v235
  %966 = vmatmul.f32.gmra.mxu0 %v20
  %v967 = vpop.f32.mrf.mxu0
  %v968 = vadd.f32 %v945, %v967
  %969 = vmatmul.f32.gmra.mxu0 %v34
  %v970 = vpop.f32.mrf.mxu0
  %v971 = vadd.f32 %v948, %v970
  %972 = vdwg.mxu0
  %973 = vmatpush.msra.mxu0 %v297
  %974 = vmatpush.msra.mxu0 %v295
  %975 = vmatpush.msra.mxu0 %v293
  %976 = vmatpush.msra.mxu0 %v291
  %977 = vmatpush.msra.mxu0 %v289
  %978 = vmatpush.msra.mxu0 %v287
  %979 = vmatpush.msra.mxu0 %v285
  %980 = vmatpush.msra.mxu0 %v283
  %981 = vmatpush.msra.mxu0 %v281
  %982 = vmatpush.msra.mxu0 %v279
  %983 = vmatpush.msra.mxu0 %v277
  %984 = vmatpush.msra.mxu0 %v275
  %985 = vmatpush.msra.mxu0 %v273
  %986 = vmatpush.msra.mxu0 %v271
  %987 = vmatpush.msra.mxu0 %v269
  %988 = vmatpush.msra.mxu0 %v267
  %989 = vmatmul.f32.gmra.mxu0 %v21
  %v990 = vpop.f32.mrf.mxu0
  %v991 = vadd.f32 %v968, %v990
  %992 = vmatmul.f32.gmra.mxu0 %v35
  %v993 = vpop.f32.mrf.mxu0
  %v994 = vadd.f32 %v971, %v993
  %995 = vdwg.mxu0
  %996 = vmatpush.msra.mxu0 %v329
  %997 = vmatpush.msra.mxu0 %v327
  %998 = vmatpush.msra.mxu0 %v325
  %999 = vmatpush.msra.mxu0 %v323
  %1000 = vmatpush.msra.mxu0 %v321
  %1001 = vmatpush.msra.mxu0 %v319
  %1002 = vmatpush.msra.mxu0 %v317
  %1003 = vmatpush.msra.mxu0 %v315
  %1004 = vmatpush.msra.mxu0 %v313
  %1005 = vmatpush.msra.mxu0 %v311
  %1006 = vmatpush.msra.mxu0 %v309
  %1007 = vmatpush.msra.mxu0 %v307
  %1008 = vmatpush.msra.mxu0 %v305
  %1009 = vmatpush.msra.mxu0 %v303
  %1010 = vmatpush.msra.mxu0 %v301
  %1011 = vmatpush.msra.mxu0 %v299
  %1012 = vmatmul.f32.gmra.mxu0 %v22
  %v1013 = vpop.f32.mrf.mxu0
  %v1014 = vadd.f32 %v991, %v1013
  %1015 = vmatmul.f32.gmra.mxu0 %v36
  %v1016 = vpop.f32.mrf.mxu0
  %v1017 = vadd.f32 %v994, %v1016
  %1018 = vdwg.mxu0
  %1019 = vmatpush.msra.mxu0 %v361
  %1020 = vmatpush.msra.mxu0 %v359
  %1021 = vmatpush.msra.mxu0 %v357
  %1022 = vmatpush.msra.mxu0 %v355
  %1023 = vmatpush.msra.mxu0 %v353
  %1024 = vmatpush.msra.mxu0 %v351
  %1025 = vmatpush.msra.mxu0 %v349
  %1026 = vmatpush.msra.mxu0 %v347
  %1027 = vmatpush.msra.mxu0 %v345
  %1028 = vmatpush.msra.mxu0 %v343
  %1029 = vmatpush.msra.mxu0 %v341
  %1030 = vmatpush.msra.mxu0 %v339
  %1031 = vmatpush.msra.mxu0 %v337
  %1032 = vmatpush.msra.mxu0 %v335
  %1033 = vmatpush.msra.mxu0 %v333
  %1034 = vmatpush.msra.mxu0 %v331
  %1035 = vmatmul.f32.gmra.mxu0 %v23
  %v1036 = vpop.f32.mrf.mxu0
  %v1037 = vadd.f32 %v1014, %v1036
  %1038 = vmatmul.f32.gmra.mxu0 %v37
  %v1039 = vpop.f32.mrf.mxu0
  %v1040 = vadd.f32 %v1017, %v1039
  %1041 = vdwg.mxu0
  %1042 = vmatpush.msra.mxu0 %v393
  %1043 = vmatpush.msra.mxu0 %v391
  %1044 = vmatpush.msra.mxu0 %v389
  %1045 = vmatpush.msra.mxu0 %v387
  %1046 = vmatpush.msra.mxu0 %v385
  %1047 = vmatpush.msra.mxu0 %v383
  %1048 = vmatpush.msra.mxu0 %v381
  %1049 = vmatpush.msra.mxu0 %v379
  %1050 = vmatpush.msra.mxu0 %v377
  %1051 = vmatpush.msra.mxu0 %v375
  %1052 = vmatpush.msra.mxu0 %v373
  %1053 = vmatpush.msra.mxu0 %v371
  %1054 = vmatpush.msra.mxu0 %v369
  %1055 = vmatpush.msra.mxu0 %v367
  %1056 = vmatpush.msra.mxu0 %v365
  %1057 = vmatpush.msra.mxu0 %v363
  %1058 = vmatmul.f32.gmra.mxu0 %v24
  %v1059 = vpop.f32.mrf.mxu0
  %v1060 = vadd.f32 %v1037, %v1059
  %1061 = vmatmul.f32.gmra.mxu0 %v38
  %v1062 = vpop.f32.mrf.mxu0
  %v1063 = vadd.f32 %v1040, %v1062
  %1064 = vdwg.mxu0
  %1065 = vmatpush.msra.mxu0 %v425
  %1066 = vmatpush.msra.mxu0 %v423
  %1067 = vmatpush.msra.mxu0 %v421
  %1068 = vmatpush.msra.mxu0 %v419
  %1069 = vmatpush.msra.mxu0 %v417
  %1070 = vmatpush.msra.mxu0 %v415
  %1071 = vmatpush.msra.mxu0 %v413
  %1072 = vmatpush.msra.mxu0 %v411
  %1073 = vmatpush.msra.mxu0 %v409
  %1074 = vmatpush.msra.mxu0 %v407
  %1075 = vmatpush.msra.mxu0 %v405
  %1076 = vmatpush.msra.mxu0 %v403
  %1077 = vmatpush.msra.mxu0 %v401
  %1078 = vmatpush.msra.mxu0 %v399
  %1079 = vmatpush.msra.mxu0 %v397
  %1080 = vmatpush.msra.mxu0 %v395
  %1081 = vmatmul.f32.gmra.mxu0 %v25
  %v1082 = vpop.f32.mrf.mxu0
  %v1083 = vadd.f32 %v1060, %v1082
  %1084 = vmatmul.f32.gmra.mxu0 %v39
  %v1085 = vpop.f32.mrf.mxu0
  %v1086 = vadd.f32 %v1063, %v1085
  %1087 = vdwg.mxu0
  %1088 = vmatpush.msra.mxu0 %v457
  %1089 = vmatpush.msra.mxu0 %v455
  %1090 = vmatpush.msra.mxu0 %v453
  %1091 = vmatpush.msra.mxu0 %v451
  %1092 = vmatpush.msra.mxu0 %v449
  %1093 = vmatpush.msra.mxu0 %v447
  %1094 = vmatpush.msra.mxu0 %v445
  %1095 = vmatpush.msra.mxu0 %v443
  %1096 = vmatpush.msra.mxu0 %v441
  %1097 = vmatpush.msra.mxu0 %v439
  %1098 = vmatpush.msra.mxu0 %v437
  %1099 = vmatpush.msra.mxu0 %v435
  %1100 = vmatpush.msra.mxu0 %v433
  %1101 = vmatpush.msra.mxu0 %v431
  %1102 = vmatpush.msra.mxu0 %v429
  %1103 = vmatpush.msra.mxu0 %v427
  %1104 = vmatmul.f32.gmra.mxu0 %v26
  %v1105 = vpop.f32.mrf.mxu0
  %v1106 = vadd.f32 %v1083, %v1105
  %1107 = vmatmul.f32.gmra.mxu0 %v40
  %v1108 = vpop.f32.mrf.mxu0
  %v1109 = vadd.f32 %v1086, %v1108
  %1110 = vdwg.mxu0
  %1111 = vmatpush.msra.mxu0 %v489
  %1112 = vmatpush.msra.mxu0 %v487
  %1113 = vmatpush.msra.mxu0 %v485
  %1114 = vmatpush.msra.mxu0 %v483
  %1115 = vmatpush.msra.mxu0 %v481
  %1116 = vmatpush.msra.mxu0 %v479
  %1117 = vmatpush.msra.mxu0 %v477
  %1118 = vmatpush.msra.mxu0 %v475
  %1119 = vmatpush.msra.mxu0 %v473
  %1120 = vmatpush.msra.mxu0 %v471
  %1121 = vmatpush.msra.mxu0 %v469
  %1122 = vmatpush.msra.mxu0 %v467
  %1123 = vmatpush.msra.mxu0 %v465
  %1124 = vmatpush.msra.mxu0 %v463
  %1125 = vmatpush.msra.mxu0 %v461
  %1126 = vmatpush.msra.mxu0 %v459
  %1127 = vmatmul.f32.gmra.mxu0 %v27
  %v1128 = vpop.f32.mrf.mxu0
  %v1129 = vadd.f32 %v1106, %v1128
  %1130 = vmatmul.f32.gmra.mxu0 %v41
  %v1131 = vpop.f32.mrf.mxu0
  %v1132 = vadd.f32 %v1109, %v1131
  %1133 = vdwg.mxu0
  %v1134 = vadd.f32 %v807, %v810
  %v1135 = vrot.slane %v1134, 4
  %v1136 = vadd.f32 %v1134, %v1135
  %v1137 = vrot.slane %v1136, 2
  %v1138 = vadd.f32 %v1136, %v1137
  %v1139 = vrot.slane %v1138, 1
  %v1140 = vadd.f32 %v1138, %v1139
  %v1141 = vadd.f32 %v1129, %v1132
  %v1142 = vrot.slane %v1141, 4
  %v1143 = vadd.f32 %v1141, %v1142
  %v1144 = vrot.slane %v1143, 2
  %v1145 = vadd.f32 %v1143, %v1144
  %v1146 = vrot.slane %v1145, 1
  %v1147 = vadd.f32 %v1145, %v1146
  %v1148 = vrcp.pop 16.0
  %v1149 = vmul.f32 16.0, %v1148
  %v1150 = vsub.f32 1.0, %v1149
  %v1151 = vmul.f32 %v1148, %v1150
  %v1152 = vadd.f32 %v1148, %v1151
  %vm1153 = vweird.f32 %v1148
  %v1154 = vsel %vm1153, %v1148, %v1152
  %v1155 = vmul.f32 %v1140, %v1154
  %v1156 = vmul.f32 %v1147, %v1154
  %v1157 = vsub.f32 %v807, %v1155
  %v1158 = vsub.f32 %v1129, %v1156
  %v1159 = vsub.f32 %v810, %v1155
  %v1160 = vsub.f32 %v1132, %v1156
  %v1161 = vmul.f32 %v1157, %v1157
  %v1162 = vmul.f32 %v1158, %v1158
  %v1163 = vmul.f32 %v1159, %v1159
  %v1164 = vmul.f32 %v1160, %v1160
  %v1165 = vadd.f32 %v1161, %v1163
  %v1166 = vrot.slane %v1165, 4
  %v1167 = vadd.f32 %v1165, %v1166
  %v1168 = vrot.slane %v1167, 2
  %v1169 = vadd.f32 %v1167, %v1168
  %v1170 = vrot.slane %v1169, 1
  %v1171 = vadd.f32 %v1169, %v1170
  %v1172 = vadd.f32 %v1162, %v1164
  %v1173 = vrot.slane %v1172, 4
  %v1174 = vadd.f32 %v1172, %v1173
  %v1175 = vrot.slane %v1174, 2
  %v1176 = vadd.f32 %v1174, %v1175
  %v1177 = vrot.slane %v1176, 1
  %v1178 = vadd.f32 %v1176, %v1177
  %v1179 = vmul.f32 %v1171, %v1154
  %v1180 = vmul.f32 %v1178, %v1154
  %v1181 = vld [vmem:[%s2] ss:$2 sm:$0x3]
  %s1182 = scalar_lea.vmem %s2, 1
  %v1183 = vld [vmem:[%s1182] ss:$2 sm:$0x3]
  %v1184 = vadd.f32 %v1181, %v1181
  %v1185 = vadd.f32 %v1179, 1e-05
  %v1186 = vadd.f32 %v1180, 1e-05
  %v1187 = vrsqrt.pop %v1185
  %v1188 = vmul.f32 %v1187, %v1185
  %v1189 = vmul.f32 %v1188, %v1187
  %v1190 = vmul.f32 0.5, %v1189
  %v1191 = vsub.f32 1.5, %v1190
  %v1192 = vmul.f32 %v1187, %v1191
  %vm1193 = vweird.f32 %v1185
  %vm1194 = vweird.f32 %v1187
  %vm1195 = vmor %vm1193, %vm1194
  %v1196 = vsel %vm1195, %v1187, %v1192
  %v1197 = vrsqrt.pop %v1186
  %v1198 = vmul.f32 %v1197, %v1186
  %v1199 = vmul.f32 %v1198, %v1197
  %v1200 = vmul.f32 0.5, %v1199
  %v1201 = vsub.f32 1.5, %v1200
  %v1202 = vmul.f32 %v1197, %v1201
  %vm1203 = vweird.f32 %v1186
  %vm1204 = vweird.f32 %v1197
  %vm1205 = vmor %vm1203, %vm1204
  %v1206 = vsel %vm1205, %v1197, %v1202
  %v1209 = vrot.slane %v1206, 7
  %vm1210 = vcmask 1040384
  %v1211 = vsel %vm1210, %v1196, %v1209
  %v1213 = vmul.f32 %v1184, %v1211
  %v1214 = vadd.f32 %v1183, %v1183
  %v1216 = vperm.slane %v1213, 0
  %v1217 = vperm.slane %v1213, 1
  %v1220 = vmul.f32 %v1157, %v1216
  %v1221 = vmul.f32 %v1158, %v1217
  %v1222 = vmul.f32 %v1159, %v1216
  %v1223 = vmul.f32 %v1160, %v1217
  %v1225 = vperm.slane %v1214, 0
  %v1226 = vperm.slane %v1214, 1
  %v1229 = vadd.f32 %v1220, %v1225
  %v1230 = vadd.f32 %v1221, %v1226
  %v1231 = vadd.f32 %v1222, %v1225
  %v1232 = vadd.f32 %v1223, %v1226
  %1233 = vst [vmem:[%s3] sm:$0xff] %v1229
  %1234 = vst [vmem:[%s3 + $0x8] sm:$0xff] %v1230
  %1235 = vst [vmem:[%s3 + $0x10] sm:$0xff] %v1231
  %1236 = vst [vmem:[%s3 + $0x18] sm:$0xff] %v1232
  // Predicated region
  $region14: #{conv_bn_add.1} parent=0 // pred_check
    _
  $region15: #{conv_bn_add.1} parent=0 // pred_check_branch
    %1238 = sbr.rel (0) target = $region17
  $region16: #{conv_bn_add.1} parent=0 // pred_region
    _
  $region17: #{conv_bn_add.1} parent=0 // pred_fallthru
    _
  // Predicated region
  $region18: #{conv_bn_add.1} parent=0 // pred_check
    _
  $region19: #{conv_bn_add.1} parent=0 // pred_check_branch
    %1240 = sbr.rel (0) target = $region21
  $region20: #{conv_bn_add.1} parent=0 // pred_region
    _
  $region21: #{conv_bn_add.1} parent=0 // pred_fallthru
    _

</llo_original>
